<compile_context>
chip_gen: v6e
topology: v6e:2x2x1
jax: 0.10.0
libtpu: 0.0.40
codegen_flags: <defaults>
</compile_context>

<pallas_src>
import jax
import jax.numpy as jnp
from jax.experimental import pallas as pl
from jax.experimental.pallas import tpu as pltpu

LANES = 128  # lane-dense classifier output width


def cnn_kernel(x_ref, w_ref, k3m_ref, wo_ref, bo_ref, out_ref):
    # x_ref  : (TB*S, D)   bf16  TB sentences, rows flattened (sentence-major)
    # w_ref  : (D, 3*2F)   bf16  fused conv taps [tap0 | tap1 | tap2], each [K2|K3]
    # k3m_ref: (1, 2F)     f32   0 in the K=2 half, -1e30 in the K=3 half
    # wo_ref : (2F, 128)   bf16  classifier weight, zero-padded to 128 lanes
    # bo_ref : (1, 128)    f32   classifier bias + folded conv bias; -1e30 pad lanes
    # out_ref: (TB, 128)   f32   softmax probs (padded lanes are exactly 0)
    tb = out_ref.shape[0]
    tbs = x_ref.shape[0]
    s = tbs // tb
    f2 = wo_ref.shape[0]

    # One fused MXU matmul for all three taps of both convolutions.
    y = jnp.dot(x_ref[...], w_ref[...],
                preferred_element_type=jnp.float32)              # (TB*S, 3*2F)
    # Sublane-tile-preserving split (s == 8 == f32 sublane quantum).
    y3 = y.reshape(tb, s, 3 * f2)                                # (TB, S, 3*2F)

    # Tap-sum convolution over windows shared by K=2 and K=3 (t = 0..S-3):
    #   c[t] = y_tap0[t] + y_tap1[t+1] + y_tap2[t+2]
    c = (y3[:, : s - 2, 0:f2]
         + y3[:, 1 : s - 1, f2:2 * f2]
         + y3[:, 2:, 2 * f2:])                                   # (TB, S-2, 2F)

    # Extra K=2-only window t = S-2 (its third tap weight is all-zero); the
    # K=3 half is disabled with the precomputed -1e30 mask so it never wins.
    c_last = (y3[:, s - 2, 0:f2]
              + y3[:, s - 1, f2:2 * f2]
              + k3m_ref[...])                                    # (TB, 2F)

    # Max-pool over time (conv bias is folded into the classifier bias).
    rep = c_last
    for t in range(s - 2):          # static, tiny trip-count — unrolled at trace time
        rep = jnp.maximum(rep, c[:, t, :])                       # (TB, 2F)

    # Classifier — rep is already the concatenated [pool2 | pool3] representation.
    logits = jnp.dot(rep.astype(wo_ref.dtype), wo_ref[...],
                     preferred_element_type=jnp.float32) + bo_ref[...]   # (TB, 128)

    # Softmax over the lane-dense padded row; padded lanes carry a -1e30 bias,
    # so exp() makes them exactly 0 and they do not affect the denominator.
    m = jnp.max(logits, axis=-1, keepdims=True)
    e = jnp.exp(logits - m)
    out_ref[...] = e * pl.reciprocal(jnp.sum(e, axis=-1, keepdims=True), approx=True)


def prepare_params(w2_t, b2, w3_t, b3, wo_t, bo, lanes=LANES):
    """Torch-layout params -> fused / folded / padded Pallas params."""
    F, _, K2, D = w2_t.shape
    K3 = w3_t.shape[2]
    O = wo_t.shape[0]
    F2 = 2 * F

    # Per-tap (D, F) slabs; pad the K=2 conv with zero taps so both share K3 taps.
    w2_taps = [jnp.transpose(w2_t[:, 0, j, :]) for j in range(K2)]
    w2_taps += [jnp.zeros((D, F), jnp.float32)] * (K3 - K2)
    w3_taps = [jnp.transpose(w3_t[:, 0, j, :]) for j in range(K3)]

    # Single fused weight slab: tap-major along the output axis, each tap is
    # [K=2 filters | K=3 filters]  ->  (D, K3 * 2F).  One MXU matmul per step.
    w_all = jnp.concatenate(
        [jnp.concatenate([a, b], axis=1) for a, b in zip(w2_taps, w3_taps)], axis=1)

    # Hoisted mask for the extra K=2-only window: kill the K=3 half with -1e30.
    k3_mask = jnp.concatenate(
        [jnp.zeros((1, F), jnp.float32), jnp.full((1, F), -1e30, jnp.float32)], axis=1)

    # Classifier, lane-dense output (classes padded to `lanes`).  The conv bias
    # is folded exactly into the classifier bias: (p + b) @ Wo + bo = p @ Wo + (b @ Wo + bo).
    wo = jnp.transpose(wo_t).astype(jnp.float32)                 # (2F, O)
    b_cat = jnp.concatenate([b2, b3]).astype(jnp.float32)        # (2F,)
    bo_fold = bo.astype(jnp.float32) + b_cat @ wo                # (O,)
    wo_pad = jnp.zeros((F2, lanes), jnp.float32).at[:, :O].set(wo)
    bo_pad = jnp.full((1, lanes), -1e30, jnp.float32).at[0, :O].set(bo_fold)

    return (w_all.astype(jnp.bfloat16), k3_mask,
            wo_pad.astype(jnp.bfloat16), bo_pad)


def cnn_forward(sen_batch, embeddings, w_all, k3_mask, wo_pad, bo_pad,
                *, output_dim, batch_tile=256):
    """sen_batch: (B, S) int32 token ids.  Returns (B, output_dim) probabilities."""
    B, S = sen_batch.shape
    D = embeddings.shape[1]
    assert S >= 3, "tap-sum convolution assumes sentence length >= 3"
    lanes = wo_pad.shape[1]

    # Embedding gather in glue, directly in bf16 (halves activation HBM traffic).
    # TODO(synk): fuse the gather into the kernel at production sizes (see header).
    emb_flat = jnp.take(embeddings.astype(jnp.bfloat16),
                        sen_batch.reshape(-1), axis=0)           # (B*S, D) bf16

    # Batch tiling: TB sentences per grid step (TB a multiple of 8, or the full
    # batch when it is small), padding the batch so the grid divides evenly.
    if B <= batch_tile:
        tb, b_pad = B, B
    else:
        tb = max((batch_tile // 8) * 8, 8)
        b_pad = ((B + tb - 1) // tb) * tb
        if b_pad > B:
            emb_flat = jnp.pad(emb_flat, ((0, (b_pad - B) * S), (0, 0)))

    out = pl.pallas_call(
        cnn_kernel,
        out_shape=jax.ShapeDtypeStruct((b_pad, lanes), jnp.float32),
        grid=(b_pad // tb,),
        in_specs=[
            pl.BlockSpec((tb * S, D), lambda i: (i, 0)),
            pl.BlockSpec(w_all.shape, lambda i: (0, 0), pipeline_mode=pl.Buffered(1)),
            pl.BlockSpec(k3_mask.shape, lambda i: (0, 0), pipeline_mode=pl.Buffered(1)),
            pl.BlockSpec(wo_pad.shape, lambda i: (0, 0), pipeline_mode=pl.Buffered(1)),
            pl.BlockSpec(bo_pad.shape, lambda i: (0, 0), pipeline_mode=pl.Buffered(1)),
        ],
        out_specs=pl.BlockSpec((tb, lanes), lambda i: (i, 0)),
        compiler_params=pltpu.CompilerParams(
            dimension_semantics=("parallel",)),                  # megacore / v7x 2 TCs
    )(emb_flat, w_all, k3_mask, wo_pad, bo_pad)

    return out[:B, :output_dim]


def reference_forward(sen_batch, embeddings, w2_t, b2, w3_t, b3, wo_t, bo):
    """Plain-JAX float32 reference of the torch forward (no ReLU, per spec)."""
    x = jnp.take(embeddings, sen_batch, axis=0)                  # (B, S, D)

    def conv_maxpool(w, b):                                      # w: (F, 1, K, D)
        K = w.shape[2]
        wins = [jnp.einsum("bkd,fkd->bf", x[:, t:t + K, :], w[:, 0]) + b
                for t in range(x.shape[1] - K + 1)]
        return jnp.max(jnp.stack(wins, axis=1), axis=1)          # (B, F)

    rep = jnp.concatenate([conv_maxpool(w2_t, b2), conv_maxpool(w3_t, b3)], axis=1)
    logits = rep @ wo_t.T + bo
    return jax.nn.softmax(logits, axis=-1)


if __name__ == "__main__":
    key = jax.random.PRNGKey(0)
    ks = jax.random.split(key, 8)

    vocab = 50          # num_embeddings
    input_dim = 32      # embedding_dim == conv kernel width (D)
    hidden_dim = 16     # conv filters per kernel size (F)
    output_dim = 4      # classes (O)
    batch = 2
    seq_len = 8

    # nn.Embedding weight (passed as `embeddings` to the torch module)
    embeddings = jax.random.normal(ks[0], (vocab, input_dim), jnp.float32) * 0.1

    # Torch-layout parameters
    w2_t = jax.random.normal(ks[1], (hidden_dim, 1, 2, input_dim), jnp.float32) * 0.1
    b2 = jax.random.normal(ks[2], (hidden_dim,), jnp.float32) * 0.1
    w3_t = jax.random.normal(ks[3], (hidden_dim, 1, 3, input_dim), jnp.float32) * 0.1
    b3 = jax.random.normal(ks[4], (hidden_dim,), jnp.float32) * 0.1
    wo_t = jax.random.normal(ks[5], (output_dim, 2 * hidden_dim), jnp.float32) * 0.1
    bo = jax.random.normal(ks[6], (output_dim,), jnp.float32) * 0.1

    # Integer token ids; sen_lengths / sen_mask_matrix are unused by the torch
    # forward (no ReLU, no length masking), so they are not needed here.
    sen_batch = jax.random.randint(ks[7], (batch, seq_len), 0, vocab, jnp.int32)

    params = prepare_params(w2_t, b2, w3_t, b3, wo_t, bo)
    out_prob = cnn_forward(sen_batch, embeddings, *params, output_dim=output_dim)
    out_prob = jax.block_until_ready(out_prob)

    ref = reference_forward(sen_batch, embeddings, w2_t, b2, w3_t, b3, wo_t, bo)

    assert out_prob.shape == (batch, output_dim)
    assert bool(jnp.all(jnp.isfinite(out_prob)))
    # rows sum to ~1 (softmax; approx-reciprocal + bf16 inputs => loose tol)
    assert bool(jnp.allclose(jnp.sum(out_prob, axis=-1), 1.0, atol=1e-2))
    # matches the float32 reference up to bf16 / approx-reciprocal drift
    assert bool(jnp.allclose(out_prob, ref, atol=1e-2))
    print("KERNEL_OK")
</pallas_src>

<mosaic_0001>
module attributes {stable_mosaic.version = 11 : i64} {
  func.func @cnn_kernel(%arg0: i32, %arg1: memref<16x32xbf16, #tpu.memory_space<vmem>>, %arg2: memref<32x96xbf16, #tpu.memory_space<vmem>>, %arg3: memref<1x32xf32, #tpu.memory_space<vmem>>, %arg4: memref<32x128xbf16, #tpu.memory_space<vmem>>, %arg5: memref<1x128xf32, #tpu.memory_space<vmem>>, %arg6: memref<2x128xf32, #tpu.memory_space<vmem>>) attributes {dimension_semantics = [#tpu.dimension_semantics<parallel>], iteration_bounds = array<i64: 1>, scalar_prefetch = 0 : i64, scratch_operands = 0 : i64, tpu.core_type = #tpu.core_type<tc>, window_params = [{transform_indices = @transform_0, window_bounds = array<i64: 16, 32>}, {pipeline_mode = #tpu.pipeline_mode<synchronous>, transform_indices = @transform_1, window_bounds = array<i64: 32, 96>}, {pipeline_mode = #tpu.pipeline_mode<synchronous>, transform_indices = @transform_2, window_bounds = array<i64: 1, 32>}, {pipeline_mode = #tpu.pipeline_mode<synchronous>, transform_indices = @transform_3, window_bounds = array<i64: 32, 128>}, {pipeline_mode = #tpu.pipeline_mode<synchronous>, transform_indices = @transform_4, window_bounds = array<i64: 1, 128>}, {transform_indices = @transform_5, window_bounds = array<i64: 2, 128>}]} {
    %c0 = arith.constant 0 : index
    %c0_0 = arith.constant 0 : index
    %0 = vector.load %arg1[%c0, %c0_0] : memref<16x32xbf16, #tpu.memory_space<vmem>>, vector<16x32xbf16>
    %c0_1 = arith.constant 0 : index
    %c0_2 = arith.constant 0 : index
    %1 = vector.load %arg2[%c0_1, %c0_2] : memref<32x96xbf16, #tpu.memory_space<vmem>>, vector<32x96xbf16>
    %cst = arith.constant dense<0.000000e+00> : vector<16x96xf32>
    %2 = tpu.matmul %0, %1, %cst {dimension_numbers = #tpu.dot_dimension_numbers<[1], [0], [0], [1], [0, 0, 1, 1], [], []>} : vector<16x32xbf16>, vector<32x96xbf16>, vector<16x96xf32> -> vector<16x96xf32>
    %3 = vector.shape_cast %2 : vector<16x96xf32> to vector<2x8x96xf32>
    %4 = vector.extract_strided_slice %3 {offsets = [0, 0, 0], sizes = [2, 6, 32], strides = [1, 1, 1]} : vector<2x8x96xf32> to vector<2x6x32xf32>
    %5 = vector.extract_strided_slice %3 {offsets = [0, 1, 32], sizes = [2, 6, 32], strides = [1, 1, 1]} : vector<2x8x96xf32> to vector<2x6x32xf32>
    %6 = arith.addf %4, %5 : vector<2x6x32xf32>
    %7 = vector.extract_strided_slice %3 {offsets = [0, 2, 64], sizes = [2, 6, 32], strides = [1, 1, 1]} : vector<2x8x96xf32> to vector<2x6x32xf32>
    %8 = arith.addf %6, %7 : vector<2x6x32xf32>
    %9 = vector.extract_strided_slice %3 {offsets = [0, 6, 0], sizes = [2, 1, 32], strides = [1, 1, 1]} : vector<2x8x96xf32> to vector<2x1x32xf32>
    %10 = vector.shape_cast %9 : vector<2x1x32xf32> to vector<2x32xf32>
    %11 = vector.extract_strided_slice %3 {offsets = [0, 7, 32], sizes = [2, 1, 32], strides = [1, 1, 1]} : vector<2x8x96xf32> to vector<2x1x32xf32>
    %12 = vector.shape_cast %11 : vector<2x1x32xf32> to vector<2x32xf32>
    %13 = arith.addf %10, %12 : vector<2x32xf32>
    %c0_3 = arith.constant 0 : index
    %c0_4 = arith.constant 0 : index
    %14 = vector.load %arg3[%c0_3, %c0_4] : memref<1x32xf32, #tpu.memory_space<vmem>>, vector<1x32xf32>
    %15 = vector.broadcast %14 : vector<1x32xf32> to vector<2x32xf32>
    %16 = arith.addf %13, %15 : vector<2x32xf32>
    %17 = vector.extract_strided_slice %8 {offsets = [0, 0, 0], sizes = [2, 1, 32], strides = [1, 1, 1]} : vector<2x6x32xf32> to vector<2x1x32xf32>
    %18 = vector.shape_cast %17 : vector<2x1x32xf32> to vector<2x32xf32>
    %19 = arith.maximumf %16, %18 : vector<2x32xf32>
    %20 = vector.extract_strided_slice %8 {offsets = [0, 1, 0], sizes = [2, 1, 32], strides = [1, 1, 1]} : vector<2x6x32xf32> to vector<2x1x32xf32>
    %21 = vector.shape_cast %20 : vector<2x1x32xf32> to vector<2x32xf32>
    %22 = arith.maximumf %19, %21 : vector<2x32xf32>
    %23 = vector.extract_strided_slice %8 {offsets = [0, 2, 0], sizes = [2, 1, 32], strides = [1, 1, 1]} : vector<2x6x32xf32> to vector<2x1x32xf32>
    %24 = vector.shape_cast %23 : vector<2x1x32xf32> to vector<2x32xf32>
    %25 = arith.maximumf %22, %24 : vector<2x32xf32>
    %26 = vector.extract_strided_slice %8 {offsets = [0, 3, 0], sizes = [2, 1, 32], strides = [1, 1, 1]} : vector<2x6x32xf32> to vector<2x1x32xf32>
    %27 = vector.shape_cast %26 : vector<2x1x32xf32> to vector<2x32xf32>
    %28 = arith.maximumf %25, %27 : vector<2x32xf32>
    %29 = vector.extract_strided_slice %8 {offsets = [0, 4, 0], sizes = [2, 1, 32], strides = [1, 1, 1]} : vector<2x6x32xf32> to vector<2x1x32xf32>
    %30 = vector.shape_cast %29 : vector<2x1x32xf32> to vector<2x32xf32>
    %31 = arith.maximumf %28, %30 : vector<2x32xf32>
    %32 = vector.extract_strided_slice %8 {offsets = [0, 5, 0], sizes = [2, 1, 32], strides = [1, 1, 1]} : vector<2x6x32xf32> to vector<2x1x32xf32>
    %33 = vector.shape_cast %32 : vector<2x1x32xf32> to vector<2x32xf32>
    %34 = arith.maximumf %31, %33 : vector<2x32xf32>
    %35 = arith.truncf %34 : vector<2x32xf32> to vector<2x32xbf16>
    %c0_5 = arith.constant 0 : index
    %c0_6 = arith.constant 0 : index
    %36 = vector.load %arg4[%c0_5, %c0_6] : memref<32x128xbf16, #tpu.memory_space<vmem>>, vector<32x128xbf16>
    %cst_7 = arith.constant dense<0.000000e+00> : vector<2x128xf32>
    %37 = tpu.matmul %35, %36, %cst_7 {dimension_numbers = #tpu.dot_dimension_numbers<[1], [0], [0], [1], [0, 0, 1, 1], [], []>} : vector<2x32xbf16>, vector<32x128xbf16>, vector<2x128xf32> -> vector<2x128xf32>
    %c0_8 = arith.constant 0 : index
    %c0_9 = arith.constant 0 : index
    %38 = vector.load %arg5[%c0_8, %c0_9] : memref<1x128xf32, #tpu.memory_space<vmem>>, vector<1x128xf32>
    %39 = vector.broadcast %38 : vector<1x128xf32> to vector<2x128xf32>
    %40 = arith.addf %37, %39 : vector<2x128xf32>
    %cst_10 = arith.constant dense<0xFF800000> : vector<2xf32>
    %41 = vector.multi_reduction <maximumf>, %40, %cst_10 [1] : vector<2x128xf32> to vector<2xf32>
    %42 = vector.shape_cast %41 : vector<2xf32> to vector<2x1xf32>
    %43 = vector.broadcast %42 : vector<2x1xf32> to vector<2x128xf32>
    %44 = arith.subf %40, %43 : vector<2x128xf32>
    %45 = math.exp %44 : vector<2x128xf32>
    %cst_11 = arith.constant dense<0.000000e+00> : vector<2xf32>
    %46 = vector.multi_reduction <add>, %45, %cst_11 [1] : vector<2x128xf32> to vector<2xf32>
    %47 = vector.shape_cast %46 : vector<2xf32> to vector<2x1xf32>
    %48 = tpu.reciprocal %47 {approx = true} : vector<2x1xf32> -> vector<2x1xf32>
    %49 = vector.broadcast %48 : vector<2x1xf32> to vector<2x128xf32>
    %50 = arith.mulf %45, %49 : vector<2x128xf32>
    %c0_12 = arith.constant 0 : index
    %c0_13 = arith.constant 0 : index
    %51 = vector.load %arg6[%c0_12, %c0_13] : memref<2x128xf32, #tpu.memory_space<vmem>>, vector<2x128xf32>
    tpu.vector_store %arg6[%c0_12, %c0_13], %50 {strides = array<i32>} : memref<2x128xf32, #tpu.memory_space<vmem>>, vector<2x128xf32>,
    return
  }
  func.func @transform_0(%arg0: i32) -> (i32, i32) {
    %c0_i32 = arith.constant 0 : i32
    %c0_i32_0 = arith.constant 0 : i32
    return %arg0, %c0_i32 : i32, i32
  }
  func.func @transform_1(%arg0: i32) -> (i32, i32) {
    %c0_i32 = arith.constant 0 : i32
    %c0_i32_0 = arith.constant 0 : i32
    %c0_i32_1 = arith.constant 0 : i32
    return %c0_i32, %c0_i32_0 : i32, i32
  }
  func.func @transform_2(%arg0: i32) -> (i32, i32) {
    %c0_i32 = arith.constant 0 : i32
    %c0_i32_0 = arith.constant 0 : i32
    %c0_i32_1 = arith.constant 0 : i32
    return %c0_i32, %c0_i32_0 : i32, i32
  }
  func.func @transform_3(%arg0: i32) -> (i32, i32) {
    %c0_i32 = arith.constant 0 : i32
    %c0_i32_0 = arith.constant 0 : i32
    %c0_i32_1 = arith.constant 0 : i32
    return %c0_i32, %c0_i32_0 : i32, i32
  }
  func.func @transform_4(%arg0: i32) -> (i32, i32) {
    %c0_i32 = arith.constant 0 : i32
    %c0_i32_0 = arith.constant 0 : i32
    %c0_i32_1 = arith.constant 0 : i32
    return %c0_i32, %c0_i32_0 : i32, i32
  }
  func.func @transform_5(%arg0: i32) -> (i32, i32) {
    %c0_i32 = arith.constant 0 : i32
    %c0_i32_0 = arith.constant 0 : i32
    return %arg0, %c0_i32 : i32, i32
  }
}

</mosaic_0001>

<llo_original>
// kernel: tpu_custom_call.1
$region0: #{tpu_custom_call.1}
  #allocation0 [shape = 'u32[]', space=smem, size = 0x4, offset = 0x4, fixed_abs, tag = 'smem constant byte address 0x4 - core index']
  #allocation1 [shape = 'u32[144,128]{1,0:T(1,128)}', space=vmem, size = 0x12000, scoped, tag = 'internal scratch']
  %s0 = inlined_call_operand.hbm [shape: bf16[16,32], index: 0, kind: input, shape index: {}]
  %s1 = inlined_call_operand.hbm [shape: bf16[32,96], index: 1, kind: input, shape index: {}]
  %s2 = inlined_call_operand.vmem [shape: f32[1,32], index: 2, kind: input, shape index: {}]
  %s3 = inlined_call_operand.hbm [shape: bf16[32,128], index: 3, kind: input, shape index: {}]
  %s4 = inlined_call_operand.vmem [shape: f32[1,128], index: 4, kind: input, shape index: {}]
  %s5 = inlined_call_operand.hbm [shape: f32[2,128], index: 5, kind: output, shape index: {}]
  %s6 = sld [smem:[#allocation0]]
  $region42: #{tpu_custom_call.1} parent=0
    _
  %s8 = ssub.s32 1, %s6
  %s9 = scalar_select 0, %s8, %s6
  $region1: #{tpu_custom_call.1} parent=0
    #allocation2 [shape = 'u8[4096]{0}', space=vmem, size = 0x1000, scoped, tag = 'input window, operand 0, single buffered']
    #allocation3 [shape = 's32[1]{0}', space=sflag, size = 0x4, scoped, tag = 'scoped memory for tpu_custom_call.1']
    #allocation4 [shape = 's32[1]{0}', space=sflag, size = 0x4, scoped, tag = 'scoped memory for tpu_custom_call.1']
    #allocation5 [shape = 'u8[8192]{0}', space=vmem, size = 0x2000, scoped, tag = 'input window, operand 1, single buffered']
    #allocation6 [shape = 's32[1]{0}', space=sflag, size = 0x4, scoped, tag = 'scoped memory for tpu_custom_call.1']
    #allocation7 [shape = 'u8[8192]{0}', space=vmem, size = 0x2000, scoped, tag = 'input window, operand 3, single buffered']
    #allocation8 [shape = 'u8[1024]{0}', space=vmem, size = 0x400, scoped, tag = 'output window, operand 0, single buffered']
    %10 = vsyncpa [#allocation3], 0
    %11 = vsyncpa [#allocation6], 0
    %12 = vsyncpa [#allocation4], 0
    // Predicated region
    $region2: #{tpu_custom_call.1} parent=1 // pred_check
      _
    $region3: #{tpu_custom_call.1} parent=1 // pred_check_branch
      %14 = sbr.rel (0) target = $region5
    $region4: #{tpu_custom_call.1} parent=1 // pred_region
      %s16 = ssub.s32 128, 128
      %17 = vsyncadd [#allocation3], %s16
      %s18 = sshll.u32 [#allocation2], 4
      %s19 = int_to_ptr.vmem [resolvable:$true] %s18
      %24 = dma.hbm_to_vmem [thread:$0]  %s0, 128, %s19, [#allocation3], 64, 64, 4
    $region5: #{tpu_custom_call.1} parent=1 // pred_fallthru
      _
    // Predicated region
    $region6: #{tpu_custom_call.1} parent=1 // pred_check
      _
    $region7: #{tpu_custom_call.1} parent=1 // pred_check_branch
      %26 = sbr.rel (0) target = $region9
    $region8: #{tpu_custom_call.1} parent=1 // pred_region
      %s28 = ssub.s32 256, 256
      %29 = vsyncadd [#allocation6], %s28
      %s30 = sshll.u32 [#allocation5], 4
      %s31 = int_to_ptr.vmem [resolvable:$true] %s30
      %36 = dma.hbm_to_vmem [thread:$0]  %s1, 256, %s31, [#allocation6], 64, 64, 4
    $region9: #{tpu_custom_call.1} parent=1 // pred_fallthru
      _
    // Predicated region
    $region10: #{tpu_custom_call.1} parent=1 // pred_check
      _
    $region11: #{tpu_custom_call.1} parent=1 // pred_check_branch
      %38 = sbr.rel (0) target = $region13
    $region12: #{tpu_custom_call.1} parent=1 // pred_region
      _
    $region13: #{tpu_custom_call.1} parent=1 // pred_fallthru
      _
    // Predicated region
    $region14: #{tpu_custom_call.1} parent=1 // pred_check
      _
    $region15: #{tpu_custom_call.1} parent=1 // pred_check_branch
      %40 = sbr.rel (0) target = $region17
    $region16: #{tpu_custom_call.1} parent=1 // pred_region
      %s42 = ssub.s32 256, 256
      %43 = vsyncadd [#allocation6], %s42
      %s44 = sshll.u32 [#allocation7], 4
      %s45 = int_to_ptr.vmem [resolvable:$true] %s44
      %50 = dma.hbm_to_vmem [thread:$0]  %s3, 256, %s45, [#allocation6], 64, 64, 4
    $region17: #{tpu_custom_call.1} parent=1 // pred_fallthru
      _
    // Predicated region
    $region18: #{tpu_custom_call.1} parent=1 // pred_check
      _
    $region19: #{tpu_custom_call.1} parent=1 // pred_check_branch
      %52 = sbr.rel (0) target = $region21
    $region20: #{tpu_custom_call.1} parent=1 // pred_region
      _
    $region21: #{tpu_custom_call.1} parent=1 // pred_fallthru
      _
    // Predicated region
    $region22: #{tpu_custom_call.1} parent=1 // pred_check
      _
    $region23: #{tpu_custom_call.1} parent=1 // pred_check_branch
      %54 = sbr.rel (0) target = $region25
    $region24: #{tpu_custom_call.1} parent=1 // pred_region
      %55 = dma.done [#allocation3], 128
    $region25: #{tpu_custom_call.1} parent=1 // pred_fallthru
      _
    // Predicated region
    $region26: #{tpu_custom_call.1} parent=1 // pred_check
      _
    $region27: #{tpu_custom_call.1} parent=1 // pred_check_branch
      %57 = sbr.rel (0) target = $region29
    $region28: #{tpu_custom_call.1} parent=1 // pred_region
      %58 = dma.done [#allocation6], 256
    $region29: #{tpu_custom_call.1} parent=1 // pred_fallthru
      _
    // Predicated region
    $region30: #{tpu_custom_call.1} parent=1 // pred_check
      _
    $region31: #{tpu_custom_call.1} parent=1 // pred_check_branch
      %60 = sbr.rel (0) target = $region33
    $region32: #{tpu_custom_call.1} parent=1 // pred_region
      %61 = dma.done [#allocation6], 256
    $region33: #{tpu_custom_call.1} parent=1 // pred_fallthru
      _
    %v63 = vld [vmem:[#allocation2] sm:$0xf]
    %v64 = vld [vmem:[#allocation2 + $0x4] sm:$0xf]
    %v65 = vld [vmem:[#allocation5] sm:$0xf]
    %v66 = vld [vmem:[#allocation5 + $0x4] sm:$0xf]
    %v67 = vld [vmem:[#allocation5 + $0x8] sm:$0xf]
    %v68 = vld [vmem:[#allocation5 + $0xc] sm:$0xf]
    %v71 = vunpack.c.l.b16 %v63
    %v72 = vunpack.c.l.b16 %v64
    %v73 = vpack.c.b16 %v72, %v71
    %v78 = vunpack.c.l.b16 %v65
    %v79 = vunpack.c.l.b16 %v66
    %v80 = vunpack.c.l.b16 %v67
    %v81 = vunpack.c.l.b16 %v68
    %v82 = vpack.c.b16 %v79, %v78
    %v83 = vpack.c.b16 %v81, %v80
    %vm86 = vcmask 261120
    %v88 = vsel %vm86, %v73, 0
    %90 = vmatprep.subr.bf16.mxu0 0
    %91 = vmatpush1.bf16.msra.mxu0 0
    %92 = vmatprep.subr.bf16.mxu0 0
    %93 = vmatpush1.bf16.msra.mxu0 0
    %94 = vmatprep.subr.bf16.mxu0 0
    %95 = vmatpush1.bf16.msra.mxu0 0
    %96 = vmatprep.subr.bf16.mxu0 0
    %97 = vmatpush1.bf16.msra.mxu0 0
    %98 = vmatprep.subr.bf16.mxu0 0
    %99 = vmatpush1.bf16.msra.mxu0 0
    %100 = vmatprep.subr.bf16.mxu0 0
    %101 = vmatpush1.bf16.msra.mxu0 0
    %102 = vmatprep.subr.bf16.mxu0 0
    %103 = vmatpush1.bf16.msra.mxu0 %v83
    %104 = vmatprep.subr.bf16.mxu0 0
    %105 = vmatpush1.bf16.msra.mxu0 %v82
    %106 = vmatprep.subr.bf16.mxu0 0
    %107 = vmatpush2.bf16.msra.mxu0 0
    %108 = vmatprep.subr.bf16.mxu0 0
    %109 = vmatpush2.bf16.msra.mxu0 0
    %110 = vmatprep.subr.bf16.mxu0 0
    %111 = vmatpush2.bf16.msra.mxu0 0
    %112 = vmatprep.subr.bf16.mxu0 0
    %113 = vmatpush2.bf16.msra.mxu0 0
    %114 = vmatprep.subr.bf16.mxu0 0
    %115 = vmatpush2.bf16.msra.mxu0 0
    %116 = vmatprep.subr.bf16.mxu0 0
    %117 = vmatpush2.bf16.msra.mxu0 0
    %118 = vmatprep.subr.bf16.mxu0 0
    %119 = vmatpush2.bf16.msra.mxu0 0
    %120 = vmatprep.subr.bf16.mxu0 0
    %121 = vmatpush2.bf16.msra.mxu0 0
    %122 = vmatprep.mubr.bf16.mxu0 0
    %123 = vmatmul.mubr.bf16.gmra.mxu0 %v88
    %v124 = vpop.f32.mrf.mxu0
    %v125 = vadd.f32 0.0, %v124
    %v126 = vpop.f32.mrf.mxu0
    %v127 = vpop.f32.mrf.mxu0
    %v128 = vadd.f32 0.0, %v127
    %v129 = vpop.f32.mrf.mxu0
    %130 = vdwg.mxu0
    %v133 = vrot.slane %v125, 1
    %v134 = vrot.slane %v128, 1
    %135 = vrot.lane.b32.xlu0 %v133, 96
    %v136 = vpop.permute.xlu0 %135
    %137 = vrot.lane.b32.xlu0 %v134, 96
    %v138 = vpop.permute.xlu0 %137
    %v141 = vadd.f32 %v125, %v136
    %v142 = vadd.f32 %v128, %v138
    %v143 = vrot.slane %v125, 2
    %v144 = vrot.slane %v128, 2
    %145 = vrot.lane.b32.xlu0 %v143, 64
    %v146 = vpop.permute.xlu0 %145
    %147 = vrot.lane.b32.xlu0 %v144, 64
    %v148 = vpop.permute.xlu0 %147
    %v151 = vadd.f32 %v141, %v146
    %v152 = vadd.f32 %v142, %v148
    %v153 = vld [vmem:[%s2] sm:$0x1]
    %v155 = vlaneseq
    %v156 = vshrl.u32 %v155, 7
    %v157 = vsub.s32 0, %v156
    %v158 = vrot.slane %v153, %v157
    %v160 = vadd.f32 %v141, %v158
    %v161 = vadd.f32 %v142, %v158
    %v164 = vrot.slane %v151, 2
    %v165 = vrot.slane %v152, 2
    %v168 = vmax.f32 %v160, %v164
    %v169 = vmax.f32 %v161, %v165
    %v170 = vrot.slane %v151, 3
    %v171 = vrot.slane %v152, 3
    %v174 = vmax.f32 %v168, %v170
    %v175 = vmax.f32 %v169, %v171
    %v176 = vrot.slane %v151, 4
    %v177 = vrot.slane %v152, 4
    %v180 = vmax.f32 %v174, %v176
    %v181 = vmax.f32 %v175, %v177
    %v182 = vrot.slane %v151, 5
    %v183 = vrot.slane %v152, 5
    %v186 = vmax.f32 %v180, %v182
    %v187 = vmax.f32 %v181, %v183
    %v188 = vrot.slane %v151, 6
    %v189 = vrot.slane %v152, 6
    %v192 = vmax.f32 %v186, %v188
    %v193 = vmax.f32 %v187, %v189
    %v194 = vrot.slane %v151, 7
    %v195 = vrot.slane %v152, 7
    %v198 = vmax.f32 %v192, %v194
    %v199 = vmax.f32 %v193, %v195
    %v200 = vpack.c.bf16 %v198, %v198
    %v201 = vpack.c.bf16 %v199, %v199
    %v202 = vld [vmem:[#allocation7] sm:$0xf]
    %v203 = vld [vmem:[#allocation7 + $0x4] sm:$0xf]
    %v204 = vld [vmem:[#allocation7 + $0x8] sm:$0xf]
    %v205 = vld [vmem:[#allocation7 + $0xc] sm:$0xf]
    %v206 = vld [vmem:[%s4] sm:$0x1]
    %v208 = vlaneseq
    %v209 = vshrl.u32 %v208, 7
    %v210 = vsub.s32 0, %v209
    %v211 = vrot.slane %v206, %v210
    %v215 = vunpack.c.l.b16 %v200
    %v216 = vunpack.c.l.b16 %v201
    %v217 = vrot.slane %v215, 6
    %v218 = vrot.slane %v216, 5
    %vm219 = vcmask 1041409
    %v220 = vsel %vm219, %v218, %v217
    %v221 = vpack.c.b16 %v220, %v220
    %v226 = vunpack.c.l.b16 %v202
    %v227 = vunpack.c.l.b16 %v203
    %v228 = vunpack.c.l.b16 %v204
    %v229 = vunpack.c.l.b16 %v205
    %v230 = vpack.c.b16 %v227, %v226
    %v231 = vpack.c.b16 %v229, %v228
    %v235 = vsel %vm86, %v221, 0
    %237 = vmatprep.subr.bf16.mxu0 0
    %238 = vmatpush1.bf16.msra.mxu0 0
    %239 = vmatprep.subr.bf16.mxu0 0
    %240 = vmatpush1.bf16.msra.mxu0 0
    %241 = vmatprep.subr.bf16.mxu0 0
    %242 = vmatpush1.bf16.msra.mxu0 0
    %243 = vmatprep.subr.bf16.mxu0 0
    %244 = vmatpush1.bf16.msra.mxu0 0
    %245 = vmatprep.subr.bf16.mxu0 0
    %246 = vmatpush1.bf16.msra.mxu0 0
    %247 = vmatprep.subr.bf16.mxu0 0
    %248 = vmatpush1.bf16.msra.mxu0 0
    %249 = vmatprep.subr.bf16.mxu0 0
    %250 = vmatpush1.bf16.msra.mxu0 %v231
    %251 = vmatprep.subr.bf16.mxu0 0
    %252 = vmatpush1.bf16.msra.mxu0 %v230
    %253 = vmatprep.subr.bf16.mxu0 0
    %254 = vmatpush2.bf16.msra.mxu0 0
    %255 = vmatprep.subr.bf16.mxu0 0
    %256 = vmatpush2.bf16.msra.mxu0 0
    %257 = vmatprep.subr.bf16.mxu0 0
    %258 = vmatpush2.bf16.msra.mxu0 0
    %259 = vmatprep.subr.bf16.mxu0 0
    %260 = vmatpush2.bf16.msra.mxu0 0
    %261 = vmatprep.subr.bf16.mxu0 0
    %262 = vmatpush2.bf16.msra.mxu0 0
    %263 = vmatprep.subr.bf16.mxu0 0
    %264 = vmatpush2.bf16.msra.mxu0 0
    %265 = vmatprep.subr.bf16.mxu0 0
    %266 = vmatpush2.bf16.msra.mxu0 0
    %267 = vmatprep.subr.bf16.mxu0 0
    %268 = vmatpush2.bf16.msra.mxu0 0
    %269 = vmatprep.mubr.bf16.mxu0 0
    %270 = vmatmul.mubr.bf16.gmra.mxu0 %v235
    %v271 = vpop.f32.mrf.mxu0
    %v272 = vadd.f32 %v211, %v271
    %v273 = vpop.f32.mrf.mxu0
    %v274 = vpop.f32.mrf.mxu0
    %v275 = vpop.f32.mrf.mxu0
    %276 = vdwg.mxu0
    %vm277 = vcmask 1041408
    %v278 = vsel %vm277, %v272, -inf
    %279 = vmax.xlane.f32.xlu0 %v278
    %v280 = vpop.xlane.xlu0 %279
    %v281 = vsub.f32 %v272, %v280
    %v282 = vmul.f32 %v281, 1.442695
    %v283 = vpow.pop %v282
    %v284 = vsel %vm277, %v283, 0.0
    %285 = vadd.xlane.f32.xlu0 %v284
    %v286 = vpop.xlane.xlu0 %285
    %v287 = vrcp.pop %v286
    %v288 = vmul.f32 %v283, %v287
    %289 = vst [vmem:[#allocation8] sm:$0x3] %v288
    // Predicated region
    $region34: #{tpu_custom_call.1} parent=1 // pred_check
      _
    $region35: #{tpu_custom_call.1} parent=1 // pred_check_branch
      %291 = sbr.rel (0) target = $region37
    $region36: #{tpu_custom_call.1} parent=1 // pred_region
      %s293 = ssub.s32 32, 32
      %294 = vsyncadd [#allocation4], %s293
      %s296 = sshll.u32 [#allocation8], 4
      %s297 = int_to_ptr.vmem [resolvable:$true] %s296
      %299 = dma.vmem_to_hbm [thread:$0]  %s297, 32, %s5, [#allocation4]
    $region37: #{tpu_custom_call.1} parent=1 // pred_fallthru
      _
    // Predicated region
    $region38: #{tpu_custom_call.1} parent=1 // pred_check
      _
    $region39: #{tpu_custom_call.1} parent=1 // pred_check_branch
      %301 = sbr.rel (0) target = $region41
    $region40: #{tpu_custom_call.1} parent=1 // pred_region
      %302 = dma.done [#allocation4], 32
    $region41: #{tpu_custom_call.1} parent=1 // pred_fallthru
      _
    %303 = vsyncpa [#allocation3], 1
    %304 = vsyncpa [#allocation6], 1
    %305 = vsyncpa [#allocation4], 1

</llo_original>
